<compile_context>
chip_gen: v5e
topology: v5e:2x2
jax: 0.10.0
libtpu: 0.0.40
codegen_flags: <defaults>
</compile_context>

<pallas_src>
import functools

import numpy as np
import jax
import jax.numpy as jnp
from jax import lax
from jax.experimental import pallas as pl
from jax.experimental.pallas import tpu as pltpu

NEG_SLOPE = 0.01  # nn.LeakyReLU default


# ----------------------------------------------------------------------------
# Fused kernel: BC-8 conv + LeakyReLU -> MaxPool2x2 -> FC-16-1 (2 chunks) + LeakyReLU
# Single invocation (no grid); whole batch + weights live in VMEM.
# ----------------------------------------------------------------------------
def plain_fused_kernel(x_ref, r1_ref, r2_ref, o_ref):
    N, H, W = x_ref.shape
    K1 = r1_ref.shape[0] // W            # 5
    P1 = (K1 - 1) // 2                   # 2
    C1 = r1_ref.shape[1] // W            # 8   (r1 cols = 2*Wo*C1 = W*C1)
    Ho, Wo = H // 2, W // 2
    C2 = r2_ref.shape[1] // Wo           # 16
    n_chunks = 2                         # FC-*-1 -> halving 1 -> 2 chunks along H
    Hc = Ho // n_chunks

    x = x_ref[...].astype(jnp.float32)                      # (N, H, W)

    # ---------------- BC-8: conv 5x5 pad 2 + LeakyReLU -------------------------
    # H-only zero pad; kernel-height im2col via 5 sublane slices (lane-dense rows).
    zrow = jnp.zeros((N, P1, W), jnp.float32)
    xh = jnp.concatenate([zrow, x, zrow], axis=1)           # (N, H+4, W)
    l1 = jnp.concatenate(
        [xh[:, i:i + H, :].reshape(N * H, W) for i in range(K1)],
        axis=1)                                             # (N*H, K1*W) = (32, 80)
    # Kernel-width + zero-pad-in-W are folded into the banded weight r1 (80, 128);
    # its output columns are parity-ordered (w%2, w//2, c) for the pool below.
    y1 = jnp.dot(l1, r1_ref[...], preferred_element_type=jnp.float32)  # (32, 128)
    y1 = jnp.maximum(y1, NEG_SLOPE * y1)

    # ---------------- M: maxpool 2x2 stride 2 ---------------------------------
    # Two aligned-half maxima: (h even|odd) pairs become lane halves after one
    # row-pair merge; (w even|odd) pairs are already the two 64-lane halves.
    L = W * C1                                              # 128
    a = y1.reshape(N * Ho, 2 * L)                           # row pairs side by side
    a = jnp.maximum(a[:, :L], a[:, L:])                     # pool over h -> (16, 128)
    half = Wo * C1                                          # 64
    pooled = jnp.maximum(a[:, :half], a[:, half:])          # pool over w -> (16, 64)
    # pooled[n*Ho + hp, wp*C1 + c]

    # ------- FC-16-1: focal conv 3x3 pad 1, halving=1 (2 chunks along H) -------
    # Kernel-height neighbours built as row shifts, zeroed at chunk boundaries
    # (that IS the per-chunk zero padding of the focal split).  Both chunks and
    # both images are rows of ONE matmul; width/channels live in the banded r2.
    NHo = N * Ho
    rid = lax.broadcasted_iota(jnp.int32, (NHo, 1), 0)
    zline = jnp.zeros((1, half), jnp.float32)
    up = jnp.concatenate([zline, pooled[:NHo - 1, :]], axis=0)
    up = jnp.where(rid % Hc == 0, 0.0, up)                  # chunk top -> zero pad
    dn = jnp.concatenate([pooled[1:, :], zline], axis=0)
    dn = jnp.where(rid % Hc == Hc - 1, 0.0, dn)             # chunk bottom -> zero pad
    l2 = jnp.concatenate([up, pooled, dn], axis=1)          # (16, 3*64) = (16, 192)
    y2 = jnp.dot(l2, r2_ref[...], preferred_element_type=jnp.float32)  # (16, 128)
    y2 = jnp.maximum(y2, NEG_SLOPE * y2)

    # Single aligned, lane-dense store: (N*Ho, Wo*C2) = (16, 128).
    o_ref[...] = y2.astype(o_ref.dtype)


# ----------------------------------------------------------------------------
# Wrapper: builds the banded (Toeplitz-along-W) weight operands and calls the kernel.
# ----------------------------------------------------------------------------
def plain_forward(x_nchw, params, layers_cfg):
    """NCHW in / NCHW out. Fused Pallas path specialized to ['BC-8','M','FC-16-1']."""
    assert layers_cfg == ['BC-8', 'M', 'FC-16-1'], "fused kernel specialized to this cfg"
    w1, w2 = params                                         # HWIO: (5,5,1,8), (3,3,8,16)
    N, Cin, H, W = x_nchw.shape
    assert Cin == 1
    K1, C1 = w1.shape[0], w1.shape[3]
    K2, C2 = w2.shape[0], w2.shape[3]
    Ho, Wo = H // 2, W // 2

    # Squeeze Cin=1 -> lane-dense (N, H, W) input (no (...,1) lane-sparse blocks).
    x = x_nchw.reshape(N, H, W).astype(jnp.float32)

    # --- banded weight for conv1: rows (i, w_src), cols ((w%2), w//2, c) --------
    # R1[(i,ws),(p,wp,c)] = w1[i, ws - w + 2, 0, c] with w = 2*wp+p (0 outside band).
    M1 = np.zeros((K1, W, W), np.float32)
    for j in range(K1):
        for w_out in range(W):
            ws = w_out + j - 2
            if 0 <= ws < W:
                M1[j, ws, w_out] = 1.0
    r1 = jnp.einsum('jsw,ijc->iswc', jnp.asarray(M1), w1[:, :, 0, :])   # (5,16,16,8)
    r1 = r1.reshape(K1, W, Wo, 2, C1).transpose(0, 1, 3, 2, 4)          # parity-major w
    r1 = r1.reshape(K1 * W, 2 * Wo * C1)                                # (80, 128)

    # --- banded weight for conv2: rows (i, w_src, ci), cols (w, c2) -------------
    # R2[(i,ws,ci),(w,c2)] = w2[i, ws - w + 1, ci, c2] (0 outside band).
    M2 = np.zeros((K2, Wo, Wo), np.float32)
    for j in range(K2):
        for w_out in range(Wo):
            ws = w_out + j - 1
            if 0 <= ws < Wo:
                M2[j, ws, w_out] = 1.0
    r2 = jnp.einsum('jsw,ijcd->iscwd', jnp.asarray(M2), w2)             # (3,8,8,8,16)
    r2 = r2.reshape(K2 * Wo * C1, Wo * C2)                              # (192, 128)

    out2d = pl.pallas_call(
        plain_fused_kernel,
        out_shape=jax.ShapeDtypeStruct((N * Ho, Wo * C2), jnp.float32),
        in_specs=[pl.BlockSpec(memory_space=pltpu.MemorySpace.VMEM)] * 3,
        out_specs=pl.BlockSpec(memory_space=pltpu.MemorySpace.VMEM),
    )(x, r1, r2)

    out = out2d.reshape(N, Ho, Wo, C2)                      # rows=(n,ho), cols=(w,c2)
    return jnp.transpose(out, (0, 3, 1, 2)).astype(x_nchw.dtype)   # NCHW


# ----------------------------------------------------------------------------
# Parameter init + pure-JAX reference (lax conv) used to validate the kernel.
# ----------------------------------------------------------------------------
def init_params(layers_cfg, in_channels, key):
    params = []
    in_c = in_channels
    first = True
    for cfg in layers_cfg:
        if cfg == 'M':
            continue
        out_c = int(cfg.split('-')[1])
        k = 5 if first else 3
        first = False
        key, sub = jax.random.split(key)
        fan_in = in_c * k * k
        w = jax.random.normal(sub, (k, k, in_c, out_c), jnp.float32) / jnp.sqrt(fan_in)
        params.append(w)  # HWIO
        in_c = out_c
    return params


def plain_forward_ref(x_nchw, params, layers_cfg):
    x = jnp.transpose(x_nchw, (0, 2, 3, 1))
    dn = ('NHWC', 'HWIO', 'NHWC')
    pi = 0
    first = True
    for cfg in layers_cfg:
        if cfg == 'M':
            N, H, W, C = x.shape
            x = x.reshape(N, H // 2, 2, W // 2, 2, C).max(axis=(2, 4))
            continue
        parts = cfg.split('-')
        w = params[pi]
        pi += 1
        pad = 2 if first else 1
        first = False
        conv = functools.partial(
            lax.conv_general_dilated, rhs=w, window_strides=(1, 1),
            padding=[(pad, pad), (pad, pad)], dimension_numbers=dn)
        if parts[0] == 'BC' or int(parts[2]) == 0:
            y = conv(x)
        else:
            n_parts = 2 ** int(parts[2])
            split = x.shape[1] // n_parts
            y = jnp.concatenate(
                [conv(x[:, i * split:(i + 1) * split]) for i in range(n_parts)],
                axis=1)
        x = jnp.where(y >= 0, y, NEG_SLOPE * y)
    return jnp.transpose(x, (0, 3, 1, 2))


if __name__ == "__main__":
    layers_cfg = ['BC-8', 'M', 'FC-16-1']
    in_channels = 1

    key = jax.random.PRNGKey(0)
    k_x, k_w = jax.random.split(key)
    x = jax.random.normal(k_x, (2, in_channels, 16, 16), jnp.float32)  # NCHW
    params = init_params(layers_cfg, in_channels, k_w)

    out = jax.block_until_ready(plain_forward(x, params, layers_cfg))
    ref = jax.block_until_ready(plain_forward_ref(x, params, layers_cfg))

    assert out.shape == (2, 16, 8, 8), out.shape
    assert bool(jnp.allclose(out, ref, atol=1e-4, rtol=1e-4)), "mismatch vs reference"
    print("KERNEL_OK")
</pallas_src>

<mosaic_0001>
module attributes {stable_mosaic.version = 11 : i64} {
  func.func @plain_fused_kernel(%arg0: memref<2x16x16xf32, #tpu.memory_space<vmem>>, %arg1: memref<80x128xf32, #tpu.memory_space<vmem>>, %arg2: memref<192x128xf32, #tpu.memory_space<vmem>>, %arg3: memref<16x128xf32, #tpu.memory_space<vmem>>) attributes {dimension_semantics = [], scalar_prefetch = 0 : i64, scratch_operands = 0 : i64, tpu.core_type = #tpu.core_type<tc>} {
    %c0 = arith.constant 0 : index
    %c0_0 = arith.constant 0 : index
    %c0_1 = arith.constant 0 : index
    %0 = vector.load %arg0[%c0, %c0_0, %c0_1] : memref<2x16x16xf32, #tpu.memory_space<vmem>>, vector<2x16x16xf32>
    %cst = arith.constant 0.000000e+00 : f32
    %1 = vector.broadcast %cst : f32 to vector<2x2x16xf32>
    %2 = tpu.concatenate %1, %0, %1 in 1 : vector<2x2x16xf32>, vector<2x16x16xf32>, vector<2x2x16xf32> -> vector<2x20x16xf32>
    %3 = vector.extract_strided_slice %2 {offsets = [0, 0, 0], sizes = [2, 16, 16], strides = [1, 1, 1]} : vector<2x20x16xf32> to vector<2x16x16xf32>
    %4 = vector.shape_cast %3 : vector<2x16x16xf32> to vector<32x16xf32>
    %5 = vector.extract_strided_slice %2 {offsets = [0, 1, 0], sizes = [2, 16, 16], strides = [1, 1, 1]} : vector<2x20x16xf32> to vector<2x16x16xf32>
    %6 = vector.shape_cast %5 : vector<2x16x16xf32> to vector<32x16xf32>
    %7 = vector.extract_strided_slice %2 {offsets = [0, 2, 0], sizes = [2, 16, 16], strides = [1, 1, 1]} : vector<2x20x16xf32> to vector<2x16x16xf32>
    %8 = vector.shape_cast %7 : vector<2x16x16xf32> to vector<32x16xf32>
    %9 = vector.extract_strided_slice %2 {offsets = [0, 3, 0], sizes = [2, 16, 16], strides = [1, 1, 1]} : vector<2x20x16xf32> to vector<2x16x16xf32>
    %10 = vector.shape_cast %9 : vector<2x16x16xf32> to vector<32x16xf32>
    %11 = vector.extract_strided_slice %2 {offsets = [0, 4, 0], sizes = [2, 16, 16], strides = [1, 1, 1]} : vector<2x20x16xf32> to vector<2x16x16xf32>
    %12 = vector.shape_cast %11 : vector<2x16x16xf32> to vector<32x16xf32>
    %13 = tpu.concatenate %4, %6, %8, %10, %12 in 1 : vector<32x16xf32>, vector<32x16xf32>, vector<32x16xf32>, vector<32x16xf32>, vector<32x16xf32> -> vector<32x80xf32>
    %c0_2 = arith.constant 0 : index
    %c0_3 = arith.constant 0 : index
    %14 = vector.load %arg1[%c0_2, %c0_3] : memref<80x128xf32, #tpu.memory_space<vmem>>, vector<80x128xf32>
    %cst_4 = arith.constant dense<0.000000e+00> : vector<32x128xf32>
    %15 = tpu.matmul %13, %14, %cst_4 {dimension_numbers = #tpu.dot_dimension_numbers<[1], [0], [0], [1], [0, 0, 1, 1], [], []>} : vector<32x80xf32>, vector<80x128xf32>, vector<32x128xf32> -> vector<32x128xf32>
    %cst_5 = arith.constant 0.00999999977 : f32
    %16 = vector.broadcast %cst_5 : f32 to vector<32x128xf32>
    %17 = arith.mulf %16, %15 : vector<32x128xf32>
    %18 = arith.maximumf %15, %17 : vector<32x128xf32>
    %19 = vector.shape_cast %18 : vector<32x128xf32> to vector<16x256xf32>
    %20 = vector.extract_strided_slice %19 {offsets = [0, 0], sizes = [16, 128], strides = [1, 1]} : vector<16x256xf32> to vector<16x128xf32>
    %21 = vector.extract_strided_slice %19 {offsets = [0, 128], sizes = [16, 128], strides = [1, 1]} : vector<16x256xf32> to vector<16x128xf32>
    %22 = arith.maximumf %20, %21 : vector<16x128xf32>
    %23 = vector.extract_strided_slice %22 {offsets = [0, 0], sizes = [16, 64], strides = [1, 1]} : vector<16x128xf32> to vector<16x64xf32>
    %24 = vector.extract_strided_slice %22 {offsets = [0, 64], sizes = [16, 64], strides = [1, 1]} : vector<16x128xf32> to vector<16x64xf32>
    %25 = arith.maximumf %23, %24 : vector<16x64xf32>
    %26 = tpu.iota {dimensions = array<i32: 0>} : vector<16x1xi32>
    %cst_6 = arith.constant 0.000000e+00 : f32
    %27 = vector.broadcast %cst_6 : f32 to vector<1x64xf32>
    %28 = vector.extract_strided_slice %25 {offsets = [0, 0], sizes = [15, 64], strides = [1, 1]} : vector<16x64xf32> to vector<15x64xf32>
    %29 = tpu.concatenate %27, %28 in 0 : vector<1x64xf32>, vector<15x64xf32> -> vector<16x64xf32>
    %c4_i32 = arith.constant 4 : i32
    %c0_i32 = arith.constant 0 : i32
    %30 = arith.cmpi eq, %c4_i32, %c0_i32 : i32
    %c1_i32 = arith.constant 1 : i32
    %31 = arith.select %30, %c1_i32, %c4_i32 : i32
    %32 = vector.broadcast %31 : i32 to vector<16x1xi32>
    %33 = arith.remsi %26, %32 : vector<16x1xi32>
    %c0_i32_7 = arith.constant 0 : i32
    %34 = vector.broadcast %c0_i32_7 : i32 to vector<16x1xi32>
    %35 = arith.cmpi ne, %33, %34 : vector<16x1xi32>
    %c0_i32_8 = arith.constant 0 : i32
    %36 = vector.broadcast %c0_i32_8 : i32 to vector<16x1xi32>
    %37 = arith.cmpi slt, %33, %36 : vector<16x1xi32>
    %c0_i32_9 = arith.constant 0 : i32
    %38 = arith.cmpi slt, %31, %c0_i32_9 : i32
    %39 = vector.broadcast %38 : i1 to vector<16x1xi1>
    %40 = vector.broadcast %39 : vector<16x1xi1> to vector<16x1xi1>
    %41 = arith.xori %37, %40 : vector<16x1xi1>
    %42 = arith.andi %41, %35 : vector<16x1xi1>
    %43 = vector.broadcast %31 : i32 to vector<16x1xi32>
    %44 = arith.addi %33, %43 : vector<16x1xi32>
    %45 = arith.select %42, %44, %33 : vector<16x1xi1>, vector<16x1xi32>
    %c0_i32_10 = arith.constant 0 : i32
    %46 = vector.broadcast %c0_i32_10 : i32 to vector<16x1xi32>
    %47 = arith.cmpi eq, %45, %46 : vector<16x1xi32>
    %cst_11 = arith.constant 0.000000e+00 : f32
    %48 = vector.shape_cast %47 : vector<16x1xi1> to vector<16x1xi1>
    %49 = vector.broadcast %48 : vector<16x1xi1> to vector<16x64xi1>
    %50 = vector.broadcast %cst_11 : f32 to vector<16x64xf32>
    %51 = arith.select %49, %50, %29 : vector<16x64xi1>, vector<16x64xf32>
    %52 = vector.extract_strided_slice %25 {offsets = [1, 0], sizes = [15, 64], strides = [1, 1]} : vector<16x64xf32> to vector<15x64xf32>
    %53 = tpu.concatenate %52, %27 in 0 : vector<15x64xf32>, vector<1x64xf32> -> vector<16x64xf32>
    %c4_i32_12 = arith.constant 4 : i32
    %c0_i32_13 = arith.constant 0 : i32
    %54 = arith.cmpi eq, %c4_i32_12, %c0_i32_13 : i32
    %c1_i32_14 = arith.constant 1 : i32
    %55 = arith.select %54, %c1_i32_14, %c4_i32_12 : i32
    %56 = vector.broadcast %55 : i32 to vector<16x1xi32>
    %57 = arith.remsi %26, %56 : vector<16x1xi32>
    %c0_i32_15 = arith.constant 0 : i32
    %58 = vector.broadcast %c0_i32_15 : i32 to vector<16x1xi32>
    %59 = arith.cmpi ne, %57, %58 : vector<16x1xi32>
    %c0_i32_16 = arith.constant 0 : i32
    %60 = vector.broadcast %c0_i32_16 : i32 to vector<16x1xi32>
    %61 = arith.cmpi slt, %57, %60 : vector<16x1xi32>
    %c0_i32_17 = arith.constant 0 : i32
    %62 = arith.cmpi slt, %55, %c0_i32_17 : i32
    %63 = vector.broadcast %62 : i1 to vector<16x1xi1>
    %64 = vector.broadcast %63 : vector<16x1xi1> to vector<16x1xi1>
    %65 = arith.xori %61, %64 : vector<16x1xi1>
    %66 = arith.andi %65, %59 : vector<16x1xi1>
    %67 = vector.broadcast %55 : i32 to vector<16x1xi32>
    %68 = arith.addi %57, %67 : vector<16x1xi32>
    %69 = arith.select %66, %68, %57 : vector<16x1xi1>, vector<16x1xi32>
    %c3_i32 = arith.constant 3 : i32
    %70 = vector.broadcast %c3_i32 : i32 to vector<16x1xi32>
    %71 = arith.cmpi eq, %69, %70 : vector<16x1xi32>
    %cst_18 = arith.constant 0.000000e+00 : f32
    %72 = vector.shape_cast %71 : vector<16x1xi1> to vector<16x1xi1>
    %73 = vector.broadcast %72 : vector<16x1xi1> to vector<16x64xi1>
    %74 = vector.broadcast %cst_18 : f32 to vector<16x64xf32>
    %75 = arith.select %73, %74, %53 : vector<16x64xi1>, vector<16x64xf32>
    %76 = tpu.concatenate %51, %25, %75 in 1 : vector<16x64xf32>, vector<16x64xf32>, vector<16x64xf32> -> vector<16x192xf32>
    %c0_19 = arith.constant 0 : index
    %c0_20 = arith.constant 0 : index
    %77 = vector.load %arg2[%c0_19, %c0_20] : memref<192x128xf32, #tpu.memory_space<vmem>>, vector<192x128xf32>
    %cst_21 = arith.constant dense<0.000000e+00> : vector<16x128xf32>
    %78 = tpu.matmul %76, %77, %cst_21 {dimension_numbers = #tpu.dot_dimension_numbers<[1], [0], [0], [1], [0, 0, 1, 1], [], []>} : vector<16x192xf32>, vector<192x128xf32>, vector<16x128xf32> -> vector<16x128xf32>
    %cst_22 = arith.constant 0.00999999977 : f32
    %79 = vector.broadcast %cst_22 : f32 to vector<16x128xf32>
    %80 = arith.mulf %79, %78 : vector<16x128xf32>
    %81 = arith.maximumf %78, %80 : vector<16x128xf32>
    %c0_23 = arith.constant 0 : index
    %c0_24 = arith.constant 0 : index
    %82 = vector.load %arg3[%c0_23, %c0_24] : memref<16x128xf32, #tpu.memory_space<vmem>>, vector<16x128xf32>
    tpu.vector_store %arg3[%c0_23, %c0_24], %81 {strides = array<i32>} : memref<16x128xf32, #tpu.memory_space<vmem>>, vector<16x128xf32>,
    return
  }
}

</mosaic_0001>

<llo_original>
// kernel: tpu_custom_call.1
$region0: #{tpu_custom_call.1}
  #allocation0 [shape = 'u32[]', space=smem, size = 0x4, offset = 0x4, fixed_abs, tag = 'smem constant byte address 0x4 - core index']
  #allocation1 [shape = 'u32[72,128]{1,0:T(1,128)}', space=vmem, size = 0x9000, scoped, tag = 'internal scratch']
  %s0 = inlined_call_operand.hbm [shape: f32[2,16,16], index: 0, kind: input, shape index: {}]
  %s1 = inlined_call_operand.hbm [shape: f32[80,128], index: 1, kind: input, shape index: {}]
  %s2 = inlined_call_operand.hbm [shape: f32[192,128], index: 2, kind: input, shape index: {}]
  %s3 = inlined_call_operand.hbm [shape: f32[16,128], index: 3, kind: output, shape index: {}]
  %s4 = sld [smem:[#allocation0]]
  $region34: #{tpu_custom_call.1} parent=0
    _
  %s6 = ssub.s32 1, %s4
  %s7 = scalar_select 0, %s6, %s4
  $region1: #{tpu_custom_call.1} parent=0
    #allocation2 [shape = 'u8[16384]{0}', space=vmem, size = 0x4000, scoped, tag = 'input window, operand 0, single buffered']
    #allocation3 [shape = 's32[1]{0}', space=sflag, size = 0x4, scoped, tag = 'scoped memory for tpu_custom_call.1']
    #allocation4 [shape = 's32[1]{0}', space=sflag, size = 0x4, scoped, tag = 'scoped memory for tpu_custom_call.1']
    #allocation5 [shape = 'u8[40960]{0}', space=vmem, size = 0xa000, scoped, tag = 'input window, operand 1, single buffered']
    #allocation6 [shape = 's32[1]{0}', space=sflag, size = 0x4, scoped, tag = 'scoped memory for tpu_custom_call.1']
    #allocation7 [shape = 'u8[98304]{0}', space=vmem, size = 0x18000, scoped, tag = 'input window, operand 2, single buffered']
    #allocation8 [shape = 'u8[8192]{0}', space=vmem, size = 0x2000, scoped, tag = 'output window, operand 0, single buffered']
    %8 = vsyncpa [#allocation3], 0
    %9 = vsyncpa [#allocation6], 0
    %10 = vsyncpa [#allocation4], 0
    // Predicated region
    $region2: #{tpu_custom_call.1} parent=1 // pred_check
      _
    $region3: #{tpu_custom_call.1} parent=1 // pred_check_branch
      %12 = sbr.rel (0) target = $region5
    $region4: #{tpu_custom_call.1} parent=1 // pred_region
      %14 = vsyncadd [#allocation3], 0
      %s15 = sshll.u32 %s0, 4
      %s16 = int_to_ptr.hbm [resolvable:$true] %s15
      %s17 = sshll.u32 [#allocation2], 4
      %s18 = int_to_ptr.vmem [resolvable:$true] %s17
      %23 = dma.hbm_to_vmem [thread:$0]  %s16, 512, %s18, [#allocation3], 128, 128, 8
    $region5: #{tpu_custom_call.1} parent=1 // pred_fallthru
      _
    // Predicated region
    $region6: #{tpu_custom_call.1} parent=1 // pred_check
      _
    $region7: #{tpu_custom_call.1} parent=1 // pred_check_branch
      %25 = sbr.rel (0) target = $region9
    $region8: #{tpu_custom_call.1} parent=1 // pred_region
      %27 = vsyncadd [#allocation6], 0
      %s28 = sshll.u32 %s1, 4
      %s29 = int_to_ptr.hbm [resolvable:$true] %s28
      %s30 = sshll.u32 [#allocation5], 4
      %s31 = int_to_ptr.vmem [resolvable:$true] %s30
      %36 = dma.hbm_to_vmem [thread:$0]  %s29, 1280, %s31, [#allocation6], 128, 128, 8
    $region9: #{tpu_custom_call.1} parent=1 // pred_fallthru
      _
    // Predicated region
    $region10: #{tpu_custom_call.1} parent=1 // pred_check
      _
    $region11: #{tpu_custom_call.1} parent=1 // pred_check_branch
      %38 = sbr.rel (0) target = $region13
    $region12: #{tpu_custom_call.1} parent=1 // pred_region
      %40 = vsyncadd [#allocation6], 0
      %s41 = sshll.u32 %s2, 4
      %s42 = int_to_ptr.hbm [resolvable:$true] %s41
      %s43 = sshll.u32 [#allocation7], 4
      %s44 = int_to_ptr.vmem [resolvable:$true] %s43
      %49 = dma.hbm_to_vmem [thread:$0]  %s42, 3072, %s44, [#allocation6], 128, 128, 8
    $region13: #{tpu_custom_call.1} parent=1 // pred_fallthru
      _
    // Predicated region
    $region14: #{tpu_custom_call.1} parent=1 // pred_check
      _
    $region15: #{tpu_custom_call.1} parent=1 // pred_check_branch
      %51 = sbr.rel (0) target = $region17
    $region16: #{tpu_custom_call.1} parent=1 // pred_region
      %53 = dma.done [#allocation3], 512
    $region17: #{tpu_custom_call.1} parent=1 // pred_fallthru
      _
    // Predicated region
    $region18: #{tpu_custom_call.1} parent=1 // pred_check
      _
    $region19: #{tpu_custom_call.1} parent=1 // pred_check_branch
      %55 = sbr.rel (0) target = $region21
    $region20: #{tpu_custom_call.1} parent=1 // pred_region
      %57 = dma.done [#allocation6], 1280
    $region21: #{tpu_custom_call.1} parent=1 // pred_fallthru
      _
    // Predicated region
    $region22: #{tpu_custom_call.1} parent=1 // pred_check
      _
    $region23: #{tpu_custom_call.1} parent=1 // pred_check_branch
      %59 = sbr.rel (0) target = $region25
    $region24: #{tpu_custom_call.1} parent=1 // pred_region
      %61 = dma.done [#allocation6], 3072
    $region25: #{tpu_custom_call.1} parent=1 // pred_fallthru
      _
    %v62 = vld [vmem:[#allocation2] sm:$0xff]
    %v63 = vld [vmem:[#allocation2 + $0x8] sm:$0xff]
    %v64 = vld [vmem:[#allocation2 + $0x10] sm:$0xff]
    %v65 = vld [vmem:[#allocation2 + $0x18] sm:$0xff]
    %vm70 = vcmask 1041408
    %v71 = vrot.slane %v62, 6
    %v72 = vrot.slane %v63, 6
    %v73 = vsel %vm70, %v71, %v72
    %v74 = vrot.slane %v64, 6
    %v75 = vrot.slane %v65, 6
    %v76 = vsel %vm70, %v74, %v75
    %v83 = vsel %vm70, 0.0, %v71
    %v84 = vsel %vm70, 0.0, %v74
    %v85 = vsel %vm70, %v72, 0.0
    %v86 = vsel %vm70, %v75, 0.0
    %vm91 = vcmask 1046528
    %v92 = vrot.slane %v83, 1
    %v93 = vrot.slane %v73, 1
    %v94 = vsel %vm91, %v92, %v93
    %v95 = vrot.slane %v85, 1
    %v96 = vsel %vm91, %v93, %v95
    %v97 = vrot.slane %v84, 1
    %v98 = vrot.slane %v76, 1
    %v99 = vsel %vm91, %v97, %v98
    %v100 = vrot.slane %v86, 1
    %v101 = vsel %vm91, %v98, %v100
    %vm102 = vcmask 1045504
    %v103 = vrot.slane %v83, 2
    %v104 = vrot.slane %v73, 2
    %v105 = vsel %vm102, %v103, %v104
    %v106 = vrot.slane %v85, 2
    %v107 = vsel %vm102, %v104, %v106
    %v108 = vrot.slane %v84, 2
    %v109 = vrot.slane %v76, 2
    %v110 = vsel %vm102, %v108, %v109
    %v111 = vrot.slane %v86, 2
    %v112 = vsel %vm102, %v109, %v111
    %vm113 = vcmask 1044480
    %v114 = vrot.slane %v83, 3
    %v115 = vrot.slane %v73, 3
    %v116 = vsel %vm113, %v114, %v115
    %v117 = vrot.slane %v85, 3
    %v118 = vsel %vm113, %v115, %v117
    %v119 = vrot.slane %v84, 3
    %v120 = vrot.slane %v76, 3
    %v121 = vsel %vm113, %v119, %v120
    %v122 = vrot.slane %v86, 3
    %v123 = vsel %vm113, %v120, %v122
    %vm124 = vcmask 1043456
    %v125 = vrot.slane %v83, 4
    %v126 = vrot.slane %v73, 4
    %v127 = vsel %vm124, %v125, %v126
    %v128 = vrot.slane %v85, 4
    %v129 = vsel %vm124, %v126, %v128
    %v130 = vrot.slane %v84, 4
    %v131 = vrot.slane %v76, 4
    %v132 = vsel %vm124, %v130, %v131
    %v133 = vrot.slane %v86, 4
    %v134 = vsel %vm124, %v131, %v133
    %135 = vrot.lane.b32.xlu0 %v94, 16
    %v136 = vpop.permute.xlu0 %135
    %137 = vrot.lane.b32.xlu0 %v96, 16
    %v138 = vpop.permute.xlu0 %137
    %139 = vrot.lane.b32.xlu0 %v99, 16
    %v140 = vpop.permute.xlu0 %139
    %141 = vrot.lane.b32.xlu0 %v101, 16
    %v142 = vpop.permute.xlu0 %141
    %147 = vrot.lane.b32.xlu0 %v105, 32
    %v148 = vpop.permute.xlu0 %147
    %149 = vrot.lane.b32.xlu0 %v107, 32
    %v150 = vpop.permute.xlu0 %149
    %151 = vrot.lane.b32.xlu0 %v110, 32
    %v152 = vpop.permute.xlu0 %151
    %153 = vrot.lane.b32.xlu0 %v112, 32
    %v154 = vpop.permute.xlu0 %153
    %159 = vrot.lane.b32.xlu0 %v116, 48
    %v160 = vpop.permute.xlu0 %159
    %161 = vrot.lane.b32.xlu0 %v118, 48
    %v162 = vpop.permute.xlu0 %161
    %163 = vrot.lane.b32.xlu0 %v121, 48
    %v164 = vpop.permute.xlu0 %163
    %165 = vrot.lane.b32.xlu0 %v123, 48
    %v166 = vpop.permute.xlu0 %165
    %171 = vrot.lane.b32.xlu0 %v127, 64
    %v172 = vpop.permute.xlu0 %171
    %173 = vrot.lane.b32.xlu0 %v129, 64
    %v174 = vpop.permute.xlu0 %173
    %175 = vrot.lane.b32.xlu0 %v132, 64
    %v176 = vpop.permute.xlu0 %175
    %177 = vrot.lane.b32.xlu0 %v134, 64
    %v178 = vpop.permute.xlu0 %177
    %vm183 = vcmask 130048
    %v184 = vsel %vm183, %v83, %v136
    %v185 = vsel %vm183, %v73, %v138
    %v186 = vsel %vm183, %v84, %v140
    %v187 = vsel %vm183, %v76, %v142
    %vm188 = vcmask 261120
    %v189 = vsel %vm188, %v184, %v148
    %v190 = vsel %vm188, %v185, %v150
    %v191 = vsel %vm188, %v186, %v152
    %v192 = vsel %vm188, %v187, %v154
    %vm193 = vcmask 392192
    %v194 = vsel %vm193, %v189, %v160
    %v195 = vsel %vm193, %v190, %v162
    %v196 = vsel %vm193, %v191, %v164
    %v197 = vsel %vm193, %v192, %v166
    %vm198 = vcmask 523264
    %v199 = vsel %vm198, %v194, %v172
    %v200 = vsel %vm198, %v195, %v174
    %v201 = vsel %vm198, %v196, %v176
    %v202 = vsel %vm198, %v197, %v178
    %v203 = vld [vmem:[#allocation5] sm:$0xff]
    %v204 = vld [vmem:[#allocation5 + $0x8] sm:$0xff]
    %v205 = vld [vmem:[#allocation5 + $0x10] sm:$0xff]
    %v206 = vld [vmem:[#allocation5 + $0x18] sm:$0xff]
    %v207 = vld [vmem:[#allocation5 + $0x20] sm:$0xff]
    %v208 = vld [vmem:[#allocation5 + $0x28] sm:$0xff]
    %v209 = vld [vmem:[#allocation5 + $0x30] sm:$0xff]
    %v210 = vld [vmem:[#allocation5 + $0x38] sm:$0xff]
    %v211 = vld [vmem:[#allocation5 + $0x40] sm:$0xff]
    %v212 = vld [vmem:[#allocation5 + $0x48] sm:$0xff]
    %vm213 = vcmask 654336
    %v215 = vsel %vm213, %v199, 0
    %v218 = vsel %vm213, %v200, 0
    %v221 = vsel %vm213, %v201, 0
    %v224 = vsel %vm213, %v202, 0
    %226 = vmatpush.msra.mxu0 0.0
    %227 = vmatpush.msra.mxu0 0.0
    %228 = vmatpush.msra.mxu0 0.0
    %229 = vmatpush.msra.mxu0 0.0
    %230 = vmatpush.msra.mxu0 0.0
    %231 = vmatpush.msra.mxu0 0.0
    %232 = vmatpush.msra.mxu0 %v212
    %233 = vmatpush.msra.mxu0 %v211
    %234 = vmatpush.msra.mxu0 %v210
    %235 = vmatpush.msra.mxu0 %v209
    %236 = vmatpush.msra.mxu0 %v208
    %237 = vmatpush.msra.mxu0 %v207
    %238 = vmatpush.msra.mxu0 %v206
    %239 = vmatpush.msra.mxu0 %v205
    %240 = vmatpush.msra.mxu0 %v204
    %241 = vmatpush.msra.mxu0 %v203
    %242 = vmatmul.f32.gmra.mxu0 %v215
    %v243 = vpop.f32.mrf.mxu0
    %v244 = vadd.f32 0.0, %v243
    %245 = vmatmul.f32.gmra.mxu0 %v218
    %v246 = vpop.f32.mrf.mxu0
    %v247 = vadd.f32 0.0, %v246
    %248 = vmatmul.f32.gmra.mxu0 %v221
    %v249 = vpop.f32.mrf.mxu0
    %v250 = vadd.f32 0.0, %v249
    %251 = vmatmul.f32.gmra.mxu0 %v224
    %v252 = vpop.f32.mrf.mxu0
    %v253 = vadd.f32 0.0, %v252
    %254 = vdwg.mxu0
    %v255 = vmul.f32 %v244, 0.01
    %v256 = vmul.f32 %v247, 0.01
    %v257 = vmul.f32 %v250, 0.01
    %v258 = vmul.f32 %v253, 0.01
    %v259 = vmax.f32 %v244, %v255
    %v260 = vmax.f32 %v247, %v256
    %v261 = vmax.f32 %v250, %v257
    %v262 = vmax.f32 %v253, %v258
    %v264 = vunpack.c.l.s4 1966171168
    %v265 = vunpack.c.0.s8 %v264
    %v266 = vperm.slane %v259, %v265
    %v268 = vunpack.c.l.s4 1966171168
    %v269 = vunpack.c.0.s8 %v268
    %v270 = vperm.slane %v260, %v269
    %v272 = vunpack.c.l.s4 1966171168
    %v273 = vunpack.c.0.s8 %v272
    %v274 = vperm.slane %v261, %v273
    %v276 = vunpack.c.l.s4 1966171168
    %v277 = vunpack.c.0.s8 %v276
    %v278 = vperm.slane %v262, %v277
    %v283 = vrot.slane %v266, 4
    %v284 = vrot.slane %v270, 4
    %v285 = vrot.slane %v274, 4
    %v286 = vrot.slane %v278, 4
    %v291 = vmax.f32 %v266, %v283
    %v292 = vmax.f32 %v270, %v284
    %v293 = vmax.f32 %v274, %v285
    %v294 = vmax.f32 %v278, %v286
    %299 = vrot.lane.b32.xlu0 %v291, 64
    %v300 = vpop.permute.xlu0 %299
    %301 = vrot.lane.b32.xlu0 %v292, 64
    %v302 = vpop.permute.xlu0 %301
    %303 = vrot.lane.b32.xlu0 %v293, 64
    %v304 = vpop.permute.xlu0 %303
    %305 = vrot.lane.b32.xlu0 %v294, 64
    %v306 = vpop.permute.xlu0 %305
    %v311 = vmax.f32 %v291, %v300
    %v312 = vmax.f32 %v292, %v302
    %v313 = vmax.f32 %v293, %v304
    %v314 = vmax.f32 %v294, %v306
    %v315 = vlaneseq
    %v316 = vshrl.u32 %v315, 7
    %v317 = vadd.s32 %v316, 8
    %322 = vst [vmem:[#allocation1] ss:$2 sm:$0xff] %v311
    %s323 = scalar_lea.vmem [#allocation1], 1
    %324 = vst [vmem:[%s323] ss:$2 sm:$0xff] %v312
    %s325 = scalar_lea.vmem [#allocation1], 16
    %326 = vst [vmem:[%s325] ss:$2 sm:$0xff] %v313
    %s327 = scalar_lea.vmem [#allocation1], 17
    %328 = vst [vmem:[%s327] ss:$2 sm:$0xff] %v314
    %v329 = vld.sshfl [vmem:[#allocation1] sm:$0xff pattern:$0x75316420]
    %v330 = vld.sshfl [vmem:[#allocation1 + $0x10] sm:$0xff pattern:$0x75316420]
    %vm331 = vcmask 1040384
    %v332 = vrot.slane %v329, 7
    %v333 = vrot.slane %v330, 7
    %v334 = vsel %vm331, %v332, %v333
    %v337 = vsel %vm331, 0.0, %v332
    %vm338 = vcmp.lt.s32.totalorder %v316, 0
    %v339 = vsub.s32 0, %v316
    %v340 = vsel %vm338, %v339, %v316
    %v341 = vshrl.u32 %v340, 2
    %v342 = vand.u32 %v340, 3
    %v343 = vsub.s32 0, %v342
    %v344 = vsel %vm338, %v343, %v342
    %vm345 = vcmp.lt.s32.totalorder %v317, 0
    %v346 = vsub.s32 0, %v317
    %v347 = vsel %vm345, %v346, %v317
    %v348 = vshrl.u32 %v347, 2
    %v349 = vand.u32 %v347, 3
    %v350 = vsub.s32 0, %v349
    %v351 = vsel %vm345, %v350, %v349
    %vm352 = vcmp.ne.s32.totalorder %v344, 0
    %vm353 = vcmp.ne.s32.totalorder %v351, 0
    %vm354 = vcmp.lt.s32.totalorder %v344, 0
    %vm355 = vcmp.lt.s32.totalorder %v351, 0
    %vm356 = vmand %vm354, %vm352
    %vm357 = vmand %vm355, %vm353
    %v358 = vadd.s32 %v344, 4
    %v359 = vadd.s32 %v351, 4
    %v360 = vsel %vm356, %v358, %v344
    %v361 = vsel %vm357, %v359, %v351
    %vm362 = vcmp.eq.s32.totalorder %v360, 0
    %vm363 = vcmp.eq.s32.totalorder %v361, 0
    %v364 = vsel %vm362, 1, 0
    %v365 = vsel %vm363, 1, 0
    %vm366 = vcmp.eq.s32.totalorder %v364, 1
    %vm367 = vcmp.eq.s32.totalorder %v365, 1
    %v368 = vsel %vm366, 0.0, %v337
    %v369 = vsel %vm367, 0.0, %v334
    %370 = vst [vmem:[#allocation1] ss:$2 sm:$0xff] %v311
    %s371 = scalar_lea.vmem [#allocation1], 1
    %372 = vst [vmem:[%s371] ss:$2 sm:$0xff] %v312
    %s373 = scalar_lea.vmem [#allocation1], 16
    %374 = vst [vmem:[%s373] ss:$2 sm:$0xff] %v313
    %s375 = scalar_lea.vmem [#allocation1], 17
    %376 = vst [vmem:[%s375] ss:$2 sm:$0xff] %v314
    %v377 = vld.sshfl [vmem:[#allocation1] sm:$0xff pattern:$0x75316420]
    %v378 = vld.sshfl [vmem:[#allocation1 + $0x10] sm:$0xff pattern:$0x75316420]
    %v379 = vrot.slane %v377, 1
    %v380 = vrot.slane %v378, 1
    %v381 = vsel %vm91, %v379, %v380
    %v384 = vsel %vm91, %v380, 0.0
    %vm385 = vcmp.eq.s32.totalorder %v360, 3
    %vm386 = vcmp.eq.s32.totalorder %v361, 3
    %v387 = vsel %vm385, 1, 0
    %v388 = vsel %vm386, 1, 0
    %vm389 = vcmp.eq.s32.totalorder %v387, 1
    %vm390 = vcmp.eq.s32.totalorder %v388, 1
    %v391 = vsel %vm389, 0.0, %v381
    %v392 = vsel %vm390, 0.0, %v384
    %393 = vst [vmem:[#allocation1] ss:$2 sm:$0xff] %v311
    %s394 = scalar_lea.vmem [#allocation1], 1
    %395 = vst [vmem:[%s394] ss:$2 sm:$0xff] %v312
    %s396 = scalar_lea.vmem [#allocation1], 16
    %397 = vst [vmem:[%s396] ss:$2 sm:$0xff] %v313
    %s398 = scalar_lea.vmem [#allocation1], 17
    %399 = vst [vmem:[%s398] ss:$2 sm:$0xff] %v314
    %v400 = vld.sshfl [vmem:[#allocation1] sm:$0xff pattern:$0x75316420]
    %v401 = vld.sshfl [vmem:[#allocation1 + $0x10] sm:$0xff pattern:$0x75316420]
    %402 = vrot.lane.b32.xlu0 %v400, 64
    %v403 = vpop.permute.xlu0 %402
    %404 = vrot.lane.b32.xlu0 %v401, 64
    %v405 = vpop.permute.xlu0 %404
    %v408 = vsel %vm198, %v368, %v403
    %v409 = vsel %vm198, %v369, %v405
    %v410 = vld [vmem:[#allocation7] sm:$0xff]
    %v411 = vld [vmem:[#allocation7 + $0x8] sm:$0xff]
    %v412 = vld [vmem:[#allocation7 + $0x10] sm:$0xff]
    %v413 = vld [vmem:[#allocation7 + $0x18] sm:$0xff]
    %v414 = vld [vmem:[#allocation7 + $0x20] sm:$0xff]
    %v415 = vld [vmem:[#allocation7 + $0x28] sm:$0xff]
    %v416 = vld [vmem:[#allocation7 + $0x30] sm:$0xff]
    %v417 = vld [vmem:[#allocation7 + $0x38] sm:$0xff]
    %v418 = vld [vmem:[#allocation7 + $0x40] sm:$0xff]
    %v419 = vld [vmem:[#allocation7 + $0x48] sm:$0xff]
    %v420 = vld [vmem:[#allocation7 + $0x50] sm:$0xff]
    %v421 = vld [vmem:[#allocation7 + $0x58] sm:$0xff]
    %v422 = vld [vmem:[#allocation7 + $0x60] sm:$0xff]
    %v423 = vld [vmem:[#allocation7 + $0x68] sm:$0xff]
    %v424 = vld [vmem:[#allocation7 + $0x70] sm:$0xff]
    %v425 = vld [vmem:[#allocation7 + $0x78] sm:$0xff]
    %v426 = vld [vmem:[#allocation7 + $0x80] sm:$0xff]
    %v427 = vld [vmem:[#allocation7 + $0x88] sm:$0xff]
    %v428 = vld [vmem:[#allocation7 + $0x90] sm:$0xff]
    %v429 = vld [vmem:[#allocation7 + $0x98] sm:$0xff]
    %v430 = vld [vmem:[#allocation7 + $0xa0] sm:$0xff]
    %v431 = vld [vmem:[#allocation7 + $0xa8] sm:$0xff]
    %v432 = vld [vmem:[#allocation7 + $0xb0] sm:$0xff]
    %v433 = vld [vmem:[#allocation7 + $0xb8] sm:$0xff]
    %v435 = vsel %vm198, %v391, 0
    %v438 = vsel %vm198, %v392, 0
    %440 = vmatpush.msra.mxu0 %v425
    %441 = vmatpush.msra.mxu0 %v424
    %442 = vmatpush.msra.mxu0 %v423
    %443 = vmatpush.msra.mxu0 %v422
    %444 = vmatpush.msra.mxu0 %v421
    %445 = vmatpush.msra.mxu0 %v420
    %446 = vmatpush.msra.mxu0 %v419
    %447 = vmatpush.msra.mxu0 %v418
    %448 = vmatpush.msra.mxu0 %v417
    %449 = vmatpush.msra.mxu0 %v416
    %450 = vmatpush.msra.mxu0 %v415
    %451 = vmatpush.msra.mxu0 %v414
    %452 = vmatpush.msra.mxu0 %v413
    %453 = vmatpush.msra.mxu0 %v412
    %454 = vmatpush.msra.mxu0 %v411
    %455 = vmatpush.msra.mxu0 %v410
    %456 = vmatmul.f32.gmra.mxu0 %v408
    %v457 = vpop.f32.mrf.mxu0
    %v458 = vadd.f32 0.0, %v457
    %459 = vmatmul.f32.gmra.mxu0 %v409
    %v460 = vpop.f32.mrf.mxu0
    %v461 = vadd.f32 0.0, %v460
    %462 = vdwg.mxu0
    %463 = vmatpush.msra.mxu0 0.0
    %464 = vmatpush.msra.mxu0 0.0
    %465 = vmatpush.msra.mxu0 0.0
    %466 = vmatpush.msra.mxu0 0.0
    %467 = vmatpush.msra.mxu0 0.0
    %468 = vmatpush.msra.mxu0 0.0
    %469 = vmatpush.msra.mxu0 0.0
    %470 = vmatpush.msra.mxu0 0.0
    %471 = vmatpush.msra.mxu0 %v433
    %472 = vmatpush.msra.mxu0 %v432
    %473 = vmatpush.msra.mxu0 %v431
    %474 = vmatpush.msra.mxu0 %v430
    %475 = vmatpush.msra.mxu0 %v429
    %476 = vmatpush.msra.mxu0 %v428
    %477 = vmatpush.msra.mxu0 %v427
    %478 = vmatpush.msra.mxu0 %v426
    %479 = vmatmul.f32.gmra.mxu0 %v435
    %v480 = vpop.f32.mrf.mxu0
    %v481 = vadd.f32 %v458, %v480
    %482 = vmatmul.f32.gmra.mxu0 %v438
    %v483 = vpop.f32.mrf.mxu0
    %v484 = vadd.f32 %v461, %v483
    %485 = vdwg.mxu0
    %v486 = vmul.f32 %v481, 0.01
    %v487 = vmul.f32 %v484, 0.01
    %v488 = vmax.f32 %v481, %v486
    %v489 = vmax.f32 %v484, %v487
    %490 = vst [vmem:[#allocation8] sm:$0xff] %v488
    %491 = vst [vmem:[#allocation8 + $0x8] sm:$0xff] %v489
    // Predicated region
    $region26: #{tpu_custom_call.1} parent=1 // pred_check
      _
    $region27: #{tpu_custom_call.1} parent=1 // pred_check_branch
      %493 = sbr.rel (0) target = $region29
    $region28: #{tpu_custom_call.1} parent=1 // pred_region
      %495 = vsyncadd [#allocation4], 0
      %s496 = sshll.u32 [#allocation8], 4
      %s497 = int_to_ptr.vmem [resolvable:$true] %s496
      %s498 = sshll.u32 %s3, 4
      %s499 = int_to_ptr.hbm [resolvable:$true] %s498
      %504 = dma.vmem_to_hbm [thread:$0]  %s497, 256, %s499, [#allocation4], 128, 128, 8
    $region29: #{tpu_custom_call.1} parent=1 // pred_fallthru
      _
    // Predicated region
    $region30: #{tpu_custom_call.1} parent=1 // pred_check
      _
    $region31: #{tpu_custom_call.1} parent=1 // pred_check_branch
      %506 = sbr.rel (0) target = $region33
    $region32: #{tpu_custom_call.1} parent=1 // pred_region
      %508 = dma.done [#allocation4], 256
    $region33: #{tpu_custom_call.1} parent=1 // pred_fallthru
      _
    %509 = vsyncpa [#allocation3], 1
    %510 = vsyncpa [#allocation6], 1
    %511 = vsyncpa [#allocation4], 1

</llo_original>
